<compile_context>
chip_gen: v5e
topology: v5e:2x2
jax: 0.10.0
libtpu: 0.0.40
codegen_flags: <defaults>
</compile_context>

<pallas_src>
import math

import jax
import jax.numpy as jnp
from jax.experimental import pallas as pl
from jax.experimental.pallas import tpu as pltpu


def make_mha_kernel(num_heads, head_dim, seq_len):

    def mha_kernel(x_ref, wqkv_ref, wot_ref, bias_ref, o_ref, ctx_ref):
        # grid = (batch, head). The head axis MUST remain the innermost,
        # sequential ("arbitrary") axis: ctx_ref is carried across it and the
        # output block index is constant along it. Flipping it to "parallel"
        # or reordering the grid silently breaks results.
        h = pl.program_id(1)

        # ---- per-head fused QKV projection (full-D contraction on the MXU).
        # The (D, 3*head_dim) weight slab for this head arrives via the
        # BlockSpec pipeline (double-buffered, overlapping the previous head's
        # attention compute), so only one head's weights are resident.
        qkv = jnp.dot(x_ref[...], wqkv_ref[...],
                      preferred_element_type=jnp.float32)        # (N, 3*hd) f32
        q = qkv[:, :head_dim].astype(jnp.bfloat16)   # 1/sqrt(hd) already in W_q
        k = qkv[:, head_dim:2 * head_dim].astype(jnp.bfloat16)
        v = qkv[:, 2 * head_dim:].astype(jnp.bfloat16)

        # ---- causal attention scores, f32 accumulation, no explicit .T
        s = jax.lax.dot_general(q, k, (((1,), (1,)), ((), ())),
                                preferred_element_type=jnp.float32)  # (N, N)
        row = jax.lax.broadcasted_iota(jnp.int32, (seq_len, seq_len), 0)
        col = jax.lax.broadcasted_iota(jnp.int32, (seq_len, seq_len), 1)
        s = jnp.where(col <= row, s, -jnp.inf)

        # ---- numerically stable softmax in f32, normalizing AFTER the PV
        # matmul (N x head_dim scale instead of an N x N multiply).
        # Every causal row has >= 1 unmasked column, so m is always finite;
        # guard this if padding / segment masks are ever added.
        m = jnp.max(s, axis=-1, keepdims=True)
        e = jnp.exp(s - m)                                       # (N, N) f32
        denom = jnp.sum(e, axis=-1, keepdims=True)               # (N, 1) f32
        ctx = jnp.dot(e.astype(jnp.bfloat16), v,
                      preferred_element_type=jnp.float32)        # (N, hd) f32
        ctx = ctx * pl.reciprocal(denom, approx=True)            # EUP reciprocal

        # stash this head's context; the output projection is deferred
        ctx_ref[h] = ctx.astype(jnp.bfloat16)

        # ---- finalize at the last head: ONE full-depth out-projection + bias
        @pl.when(h == num_heads - 1)
        def _():
            ctx_all = jnp.concatenate(
                [ctx_ref[hh] for hh in range(num_heads)], axis=-1)  # (N, D) bf16
            out = jnp.dot(ctx_all, wot_ref[...],
                          preferred_element_type=jnp.float32)       # (N, D) f32
            o_ref[...] = out + bias_ref[...]

    return mha_kernel


def _build_fused_qkv_weight(w_q, w_k, w_v, num_heads, head_dim):
    """Pack W_q|W_k|W_v into a head-major (H, D, 3*head_dim) weight; head h's
    slab is [Q_h | K_h | V_h] along the last axis. The 1/sqrt(head_dim)
    attention scale is folded into the Q columns in f32 before the bf16 cast.
    One-time wrapper-side weight preparation (in a real model this is free)."""
    D = w_q.shape[0]
    scale = 1.0 / math.sqrt(head_dim)
    wq = (w_q * scale).reshape(D, num_heads, head_dim)
    wk = w_k.reshape(D, num_heads, head_dim)
    wv = w_v.reshape(D, num_heads, head_dim)
    fused = jnp.concatenate([wq, wk, wv], axis=-1)     # (D, H, 3*hd)
    return jnp.transpose(fused, (1, 0, 2))             # (H, D, 3*hd)


def _derived_vmem_limit(N, D, num_heads, head_dim):
    """VMEM budget derived from the actual resident blocks (+headroom),
    clamped to stay inside every generation's physical VMEM (64 MiB v7x)."""
    bf16, f32 = 2, 4
    blocks = (
        2 * N * D * bf16                    # x block, double-buffered
        + 2 * D * 3 * head_dim * bf16       # per-head fused QKV weight slab
        + 2 * D * D * bf16                  # W_out^T (grid-invariant)
        + 2 * D * f32                       # out-proj bias
        + 2 * N * D * f32                   # resident f32 output block
        + num_heads * N * head_dim * bf16   # ctx scratch
        + 4 * N * N * f32                   # score / exp temporaries
        + 4 * N * D * f32                   # misc temporaries / headroom
    )
    return int(min(max(2 * blocks, 4 * 1024 * 1024), 56 * 1024 * 1024))


def mha_einsum_pallas(x, w_q, w_k, w_v, w_out, b_out, num_heads):
    B, N, D = x.shape
    # inherited from the module's einsum 'bnd,di->bni' followed by head reshape
    assert w_q.shape == (D, D), "MHAEinsum as written requires d_in == d_out"
    assert D % num_heads == 0, "d_out must be divisible by num_heads"
    head_dim = D // num_heads

    # bf16 MXU operands; f32 accumulation happens in-kernel
    x_bf = x.astype(jnp.bfloat16)
    w_qkv = _build_fused_qkv_weight(w_q, w_k, w_v, num_heads, head_dim).astype(jnp.bfloat16)
    wo_t = w_out.T.astype(jnp.bfloat16)            # pre-transposed once
    bias = b_out.reshape(1, D).astype(jnp.float32)

    kernel = make_mha_kernel(num_heads, head_dim, N)

    out = pl.pallas_call(
        kernel,
        out_shape=jax.ShapeDtypeStruct((B, N, D), jnp.float32),
        grid=(B, num_heads),
        in_specs=[
            pl.BlockSpec((None, N, D), lambda b, h: (b, 0, 0)),              # x (one batch)
            pl.BlockSpec((None, D, 3 * head_dim), lambda b, h: (h, 0, 0)),   # head-h QKV weight slab
            pl.BlockSpec((D, D), lambda b, h: (0, 0)),                       # W_out^T (grid-invariant)
            pl.BlockSpec((1, D), lambda b, h: (0, 0)),                       # out-proj bias
        ],
        # written only at the last head step (block index constant across h)
        out_specs=pl.BlockSpec((None, N, D), lambda b, h: (b, 0, 0)),
        scratch_shapes=[
            pltpu.VMEM((num_heads, N, head_dim), jnp.bfloat16),   # per-head context
        ],
        compiler_params=pltpu.CompilerParams(
            # batch shards across TensorCores; the head axis stays sequential
            dimension_semantics=("parallel", "arbitrary"),
            vmem_limit_bytes=_derived_vmem_limit(N, D, num_heads, head_dim),
        ),
    )(x_bf, w_qkv, wo_t, bias)
    return out


def mha_einsum_reference(x, w_q, w_k, w_v, w_out, b_out, num_heads):
    """Pure-JAX f32 mirror of the PyTorch forward (dropout = identity)."""
    B, N, D = x.shape
    head_dim = D // num_heads
    Q = jnp.einsum("bnd,di->bni", x, w_q)
    K = jnp.einsum("bnd,di->bni", x, w_k)
    V = jnp.einsum("bnd,di->bni", x, w_v)
    Q = Q.reshape(B, N, num_heads, head_dim).transpose(0, 2, 1, 3)
    K = K.reshape(B, N, num_heads, head_dim).transpose(0, 2, 1, 3)
    V = V.reshape(B, N, num_heads, head_dim).transpose(0, 2, 1, 3)
    scores = jnp.einsum("bhnd,bhmd->bhnm", Q, K) / math.sqrt(head_dim)
    mask = jnp.triu(jnp.ones((N, N), dtype=bool), k=1)
    scores = jnp.where(mask[None, None], -jnp.inf, scores)
    attn = jax.nn.softmax(scores, axis=-1)
    ctx = jnp.einsum("bhnm,bhmd->bhnd", attn, V)
    ctx = ctx.transpose(0, 2, 1, 3).reshape(B, N, D)
    return ctx @ w_out.T + b_out


if __name__ == "__main__":
    # Small shapes consistent with the module (d_in == d_out required by the
    # original einsum 'bnd,di->bni' followed by the head reshape).
    B = 2
    N = 8                 # seq length == context_length
    d_in = d_out = 32
    num_heads = 4

    key = jax.random.PRNGKey(0)
    kx, kq, kk, kv, kwo, kbo = jax.random.split(key, 6)

    x = jax.random.normal(kx, (B, N, d_in), dtype=jnp.float32)

    # kaiming_uniform_(a=sqrt(5)) on shape (d_out, d_in): bound = 1/sqrt(fan_in)
    bound_qkv = 1.0 / math.sqrt(d_in)
    w_q = jax.random.uniform(kq, (d_out, d_in), jnp.float32, -bound_qkv, bound_qkv)
    w_k = jax.random.uniform(kk, (d_out, d_in), jnp.float32, -bound_qkv, bound_qkv)
    w_v = jax.random.uniform(kv, (d_out, d_in), jnp.float32, -bound_qkv, bound_qkv)

    # nn.Linear(d_out, d_out) default init: uniform(-1/sqrt(d_out), 1/sqrt(d_out))
    bound_o = 1.0 / math.sqrt(d_out)
    w_out = jax.random.uniform(kwo, (d_out, d_out), jnp.float32, -bound_o, bound_o)
    b_out = jax.random.uniform(kbo, (d_out,), jnp.float32, -bound_o, bound_o)

    out = mha_einsum_pallas(x, w_q, w_k, w_v, w_out, b_out, num_heads)
    out = jax.block_until_ready(out)

    ref = mha_einsum_reference(x, w_q, w_k, w_v, w_out, b_out, num_heads)
    assert out.shape == (B, N, d_out)
    # bf16 MXU operands + approx reciprocal -> looser tolerance than pure f32
    err = float(jnp.max(jnp.abs(out - ref)))
    assert jnp.allclose(out, ref, atol=2e-2, rtol=2e-2), f"mismatch vs reference (max abs err {err})"

    print("KERNEL_OK")
</pallas_src>

<mosaic_0001>
module attributes {stable_mosaic.version = 11 : i64} {
  func.func @mha_kernel(%arg0: i32, %arg1: i32, %arg2: memref<1x8x32xbf16, #tpu.memory_space<vmem>>, %arg3: memref<1x32x24xbf16, #tpu.memory_space<vmem>>, %arg4: memref<32x32xbf16, #tpu.memory_space<vmem>>, %arg5: memref<1x32xf32, #tpu.memory_space<vmem>>, %arg6: memref<1x8x32xf32, #tpu.memory_space<vmem>>, %arg7: memref<4x8x8xbf16, #tpu.memory_space<vmem>>) attributes {dimension_semantics = [#tpu.dimension_semantics<parallel>, #tpu.dimension_semantics<arbitrary>], iteration_bounds = array<i64: 2, 4>, scalar_prefetch = 0 : i64, scratch_operands = 1 : i64, tpu.core_type = #tpu.core_type<tc>, window_params = [{transform_indices = @transform_0, window_bounds = array<i64: 1, 8, 32>}, {transform_indices = @transform_1, window_bounds = array<i64: 1, 32, 24>}, {pipeline_mode = #tpu.pipeline_mode<synchronous>, transform_indices = @transform_2, window_bounds = array<i64: 32, 32>}, {pipeline_mode = #tpu.pipeline_mode<synchronous>, transform_indices = @transform_3, window_bounds = array<i64: 1, 32>}, {transform_indices = @transform_4, window_bounds = array<i64: 1, 8, 32>}]} {
    %c0 = arith.constant 0 : index
    %c0_0 = arith.constant 0 : index
    %c0_1 = arith.constant 0 : index
    %0 = vector.load %arg2[%c0, %c0_0, %c0_1] : memref<1x8x32xbf16, #tpu.memory_space<vmem>>, vector<1x8x32xbf16>
    %1 = vector.shape_cast %0 : vector<1x8x32xbf16> to vector<8x32xbf16>
    %c0_2 = arith.constant 0 : index
    %c0_3 = arith.constant 0 : index
    %c0_4 = arith.constant 0 : index
    %2 = vector.load %arg3[%c0_2, %c0_3, %c0_4] : memref<1x32x24xbf16, #tpu.memory_space<vmem>>, vector<1x32x24xbf16>
    %3 = vector.shape_cast %2 : vector<1x32x24xbf16> to vector<32x24xbf16>
    %cst = arith.constant dense<0.000000e+00> : vector<8x24xf32>
    %4 = tpu.matmul %1, %3, %cst {dimension_numbers = #tpu.dot_dimension_numbers<[1], [0], [0], [1], [0, 0, 1, 1], [], []>} : vector<8x32xbf16>, vector<32x24xbf16>, vector<8x24xf32> -> vector<8x24xf32>
    %5 = vector.extract_strided_slice %4 {offsets = [0, 0], sizes = [8, 8], strides = [1, 1]} : vector<8x24xf32> to vector<8x8xf32>
    %6 = arith.truncf %5 : vector<8x8xf32> to vector<8x8xbf16>
    %7 = vector.extract_strided_slice %4 {offsets = [0, 8], sizes = [8, 8], strides = [1, 1]} : vector<8x24xf32> to vector<8x8xf32>
    %8 = arith.truncf %7 : vector<8x8xf32> to vector<8x8xbf16>
    %9 = vector.extract_strided_slice %4 {offsets = [0, 16], sizes = [8, 8], strides = [1, 1]} : vector<8x24xf32> to vector<8x8xf32>
    %10 = arith.truncf %9 : vector<8x8xf32> to vector<8x8xbf16>
    %cst_5 = arith.constant dense<0.000000e+00> : vector<8x8xf32>
    %11 = tpu.matmul %6, %8, %cst_5 {dimension_numbers = #tpu.dot_dimension_numbers<[1], [1], [0], [0], [0, 0, 1, 0], [], []>} : vector<8x8xbf16>, vector<8x8xbf16>, vector<8x8xf32> -> vector<8x8xf32>
    %12 = tpu.iota {dimensions = array<i32: 0>} : vector<8x8xi32>
    %13 = tpu.iota {dimensions = array<i32: 1>} : vector<8x8xi32>
    %14 = arith.cmpi sle, %13, %12 : vector<8x8xi32>
    %cst_6 = arith.constant 0xFF800000 : f32
    %15 = vector.broadcast %cst_6 : f32 to vector<8x8xf32>
    %16 = arith.select %14, %11, %15 : vector<8x8xi1>, vector<8x8xf32>
    %cst_7 = arith.constant dense<0xFF800000> : vector<8xf32>
    %17 = vector.multi_reduction <maximumf>, %16, %cst_7 [1] : vector<8x8xf32> to vector<8xf32>
    %18 = vector.shape_cast %17 : vector<8xf32> to vector<8x1xf32>
    %19 = vector.broadcast %18 : vector<8x1xf32> to vector<8x8xf32>
    %20 = arith.subf %16, %19 : vector<8x8xf32>
    %21 = math.exp %20 : vector<8x8xf32>
    %cst_8 = arith.constant dense<0.000000e+00> : vector<8xf32>
    %22 = vector.multi_reduction <add>, %21, %cst_8 [1] : vector<8x8xf32> to vector<8xf32>
    %23 = vector.shape_cast %22 : vector<8xf32> to vector<8x1xf32>
    %24 = arith.truncf %21 : vector<8x8xf32> to vector<8x8xbf16>
    %cst_9 = arith.constant dense<0.000000e+00> : vector<8x8xf32>
    %25 = tpu.matmul %24, %10, %cst_9 {dimension_numbers = #tpu.dot_dimension_numbers<[1], [0], [0], [1], [0, 0, 1, 1], [], []>} : vector<8x8xbf16>, vector<8x8xbf16>, vector<8x8xf32> -> vector<8x8xf32>
    %26 = tpu.reciprocal %23 {approx = true} : vector<8x1xf32> -> vector<8x1xf32>
    %27 = vector.broadcast %26 : vector<8x1xf32> to vector<8x8xf32>
    %28 = arith.mulf %25, %27 : vector<8x8xf32>
    %29 = arith.truncf %28 : vector<8x8xf32> to vector<8x8xbf16>
    %30 = arith.index_cast %arg1 : i32 to index
    %c0_10 = arith.constant 0 : index
    %c0_11 = arith.constant 0 : index
    %31 = vector.load %arg7[%30, %c0_10, %c0_11] : memref<4x8x8xbf16, #tpu.memory_space<vmem>>, vector<1x8x8xbf16>
    %32 = vector.shape_cast %31 : vector<1x8x8xbf16> to vector<8x8xbf16>
    %33 = vector.shape_cast %29 : vector<8x8xbf16> to vector<1x8x8xbf16>
    tpu.vector_store %arg7[%30, %c0_10, %c0_11], %33 {strides = array<i32>} : memref<4x8x8xbf16, #tpu.memory_space<vmem>>, vector<1x8x8xbf16>,
    %c3_i32 = arith.constant 3 : i32
    %34 = arith.cmpi eq, %arg1, %c3_i32 : i32
    %35 = arith.extui %34 : i1 to i32
    %c0_i32 = arith.constant 0 : i32
    %36 = arith.cmpi ne, %35, %c0_i32 : i32
    scf.if %36 {
      %c0_12 = arith.constant 0 : index
      %c0_13 = arith.constant 0 : index
      %c0_14 = arith.constant 0 : index
      %37 = vector.load %arg7[%c0_12, %c0_13, %c0_14] : memref<4x8x8xbf16, #tpu.memory_space<vmem>>, vector<1x8x8xbf16>
      %38 = vector.shape_cast %37 : vector<1x8x8xbf16> to vector<8x8xbf16>
      %c1 = arith.constant 1 : index
      %c0_15 = arith.constant 0 : index
      %c0_16 = arith.constant 0 : index
      %39 = vector.load %arg7[%c1, %c0_15, %c0_16] : memref<4x8x8xbf16, #tpu.memory_space<vmem>>, vector<1x8x8xbf16>
      %40 = vector.shape_cast %39 : vector<1x8x8xbf16> to vector<8x8xbf16>
      %c2 = arith.constant 2 : index
      %c0_17 = arith.constant 0 : index
      %c0_18 = arith.constant 0 : index
      %41 = vector.load %arg7[%c2, %c0_17, %c0_18] : memref<4x8x8xbf16, #tpu.memory_space<vmem>>, vector<1x8x8xbf16>
      %42 = vector.shape_cast %41 : vector<1x8x8xbf16> to vector<8x8xbf16>
      %c3 = arith.constant 3 : index
      %c0_19 = arith.constant 0 : index
      %c0_20 = arith.constant 0 : index
      %43 = vector.load %arg7[%c3, %c0_19, %c0_20] : memref<4x8x8xbf16, #tpu.memory_space<vmem>>, vector<1x8x8xbf16>
      %44 = vector.shape_cast %43 : vector<1x8x8xbf16> to vector<8x8xbf16>
      %45 = tpu.concatenate %38, %40, %42, %44 in 1 : vector<8x8xbf16>, vector<8x8xbf16>, vector<8x8xbf16>, vector<8x8xbf16> -> vector<8x32xbf16>
      %c0_21 = arith.constant 0 : index
      %c0_22 = arith.constant 0 : index
      %46 = vector.load %arg4[%c0_21, %c0_22] : memref<32x32xbf16, #tpu.memory_space<vmem>>, vector<32x32xbf16>
      %cst_23 = arith.constant dense<0.000000e+00> : vector<8x32xf32>
      %47 = tpu.matmul %45, %46, %cst_23 {dimension_numbers = #tpu.dot_dimension_numbers<[1], [0], [0], [1], [0, 0, 1, 1], [], []>} : vector<8x32xbf16>, vector<32x32xbf16>, vector<8x32xf32> -> vector<8x32xf32>
      %c0_24 = arith.constant 0 : index
      %c0_25 = arith.constant 0 : index
      %48 = vector.load %arg5[%c0_24, %c0_25] : memref<1x32xf32, #tpu.memory_space<vmem>>, vector<1x32xf32>
      %49 = vector.broadcast %48 : vector<1x32xf32> to vector<8x32xf32>
      %50 = arith.addf %47, %49 : vector<8x32xf32>
      %c0_26 = arith.constant 0 : index
      %c0_27 = arith.constant 0 : index
      %c0_28 = arith.constant 0 : index
      %51 = vector.load %arg6[%c0_26, %c0_27, %c0_28] : memref<1x8x32xf32, #tpu.memory_space<vmem>>, vector<1x8x32xf32>
      %52 = vector.shape_cast %51 : vector<1x8x32xf32> to vector<8x32xf32>
      %53 = vector.shape_cast %50 : vector<8x32xf32> to vector<1x8x32xf32>
      tpu.vector_store %arg6[%c0_26, %c0_27, %c0_28], %53 {strides = array<i32>} : memref<1x8x32xf32, #tpu.memory_space<vmem>>, vector<1x8x32xf32>,
    } else {
    }
    return
  }
  func.func @transform_0(%arg0: i32, %arg1: i32) -> (i32, i32, i32) {
    %c0_i32 = arith.constant 0 : i32
    %c0_i32_0 = arith.constant 0 : i32
    %c0_i32_1 = arith.constant 0 : i32
    return %arg0, %c0_i32, %c0_i32_0 : i32, i32, i32
  }
  func.func @transform_1(%arg0: i32, %arg1: i32) -> (i32, i32, i32) {
    %c0_i32 = arith.constant 0 : i32
    %c0_i32_0 = arith.constant 0 : i32
    %c0_i32_1 = arith.constant 0 : i32
    return %arg1, %c0_i32, %c0_i32_0 : i32, i32, i32
  }
  func.func @transform_2(%arg0: i32, %arg1: i32) -> (i32, i32) {
    %c0_i32 = arith.constant 0 : i32
    %c0_i32_0 = arith.constant 0 : i32
    %c0_i32_1 = arith.constant 0 : i32
    return %c0_i32, %c0_i32_0 : i32, i32
  }
  func.func @transform_3(%arg0: i32, %arg1: i32) -> (i32, i32) {
    %c0_i32 = arith.constant 0 : i32
    %c0_i32_0 = arith.constant 0 : i32
    %c0_i32_1 = arith.constant 0 : i32
    return %c0_i32, %c0_i32_0 : i32, i32
  }
  func.func @transform_4(%arg0: i32, %arg1: i32) -> (i32, i32, i32) {
    %c0_i32 = arith.constant 0 : i32
    %c0_i32_0 = arith.constant 0 : i32
    %c0_i32_1 = arith.constant 0 : i32
    return %arg0, %c0_i32, %c0_i32_0 : i32, i32, i32
  }
}

</mosaic_0001>

<llo_original>
// kernel: tpu_custom_call.1
$region0: #{tpu_custom_call.1}
  #allocation0 [shape = 'u32[]', space=smem, size = 0x4, offset = 0x4, fixed_abs, tag = 'smem constant byte address 0x4 - core index']
  #allocation1 [shape = 'u32[72,128]{1,0:T(1,128)}', space=vmem, size = 0x9000, scoped, tag = 'internal scratch']
  #allocation2 [shape = 'bf16[4,8,8]{2,1,0:T(8,128)(2,1)}', space=vmem, size = 0x2000, scoped, tag = 'scratch operand']
  %s0 = inlined_call_operand.vmem [shape: bf16[2,8,32], index: 0, kind: input, shape index: {}]
  %s1 = inlined_call_operand.vmem [shape: bf16[4,32,24], index: 1, kind: input, shape index: {}]
  %s2 = inlined_call_operand.vmem [shape: bf16[32,32], index: 2, kind: input, shape index: {}]
  %s3 = inlined_call_operand.vmem [shape: f32[1,32], index: 3, kind: input, shape index: {}]
  %s4 = inlined_call_operand.hbm [shape: f32[2,8,32], index: 4, kind: output, shape index: {}]
  %s5 = sld [smem:[#allocation0]]
  $region53: #{tpu_custom_call.1} parent=0
    _
  %s7 = ssub.s32 1, %s5
  %s8 = scalar_select 0, %s7, %s5
  $region1: #{tpu_custom_call.1} parent=0
    #allocation3 [shape = 'u8[8192]{0}', space=vmem, size = 0x2000, scoped, tag = 'output window, operand 0']
    #allocation4 [shape = 's32[2]{0}', space=sflag, size = 0x8, scoped, tag = 'scoped memory for tpu_custom_call.1']
    %9 = vsyncpa [#allocation4], 0
    %s10 = scalar_lea.sflag [#allocation4], 1
    %11 = vsyncpa %s10, 0
    loop: start=0, step=1, limit=10
    $region2: #{tpu_custom_call.1} parent=1 // loop_pre_header
      _
    $region3: #{tpu_custom_call.1} parent=1 // loop_header
      %s13 = sphi 0, %s17
      %p14 = scmp.ge.s32.totalorder %s13, 10
      %s20 = sphi 0, %s32
      %s21 = sphi 0, %s28
      %s22 = sphi 0, %s20
      %s23 = sphi 0, %s21
      %s24 = sphi 0, %s22
      %s25 = sphi 0, %s23
      %s35 = sphi 0, %s37
      %s38 = sphi 0, %s35
      %s39 = sphi 0, %s38
      %s55 = sphi 0, %s39
      %s61 = sphi 0, %s63
      %s64 = sphi 0, %s61
      %s65 = sphi 0, %s64
      %s81 = sphi 0, %s65
      %s85 = sphi 0, %s85
      %s87 = sphi 0, %s85
      %s88 = sphi 0, %s87
      %s102 = sphi 0, %s88
      %s106 = sphi 0, %s106
      %s108 = sphi 0, %s106
      %s109 = sphi 0, %s108
      %s123 = sphi 0, %s109
      %s129 = sphi 0, %s131
      %s132 = sphi 0, %s129
      %s133 = sphi 0, %s132
      %s149 = sphi 0, %s133
    $region4: #{tpu_custom_call.1} parent=1 // loop_header_branch
      %16 = sbr.rel (%p14) target = $region8
    $region5: #{tpu_custom_call.1} parent=1 // loop_body
      %s18 = ssub.s32 %s13, 1
      %s19 = ssub.s32 %s13, 2
      %s26 = sadd.s32 1, %s21
      %p27 = scmp.ge.s32.totalorder %s26, 4
      %s28 = scalar_select %p27, 0, %s26
      %s29 = sadd.s32 1, %s20
      %s30 = scalar_select %p27, %s29, %s20
      %p31 = scmp.ge.s32.totalorder %s30, 2
      %s32 = scalar_select %p31, 0, %s30
      %s33 = ssub.s32 %s20, %s32
      %p34 = scmp.eq.s32.totalorder %s33, 0
      %s36 = sadd.s32 %s35, 1
      %s37 = scalar_select %p34, %s35, %s36
      %p40 = pneg %p34
      %p41 = scmp.eq.s32.totalorder %s13, 7
      %p42 = por %p40, %p41
      %p43 = scmp.ne.s32.totalorder %s35, %s38
      %p44 = scmp.eq.s32.totalorder %s13, 0
      %p45 = por %p43, %p44
      %p46 = scmp.ne.s32.totalorder %s35, %s38
      %p47 = scmp.eq.s32.totalorder %s18, 7
      %p48 = por %p46, %p47
      %p49 = scmp.ne.s32.totalorder %s38, %s39
      %p50 = scmp.eq.s32.totalorder %s18, 0
      %p51 = por %p49, %p50
      %p52 = scmp.ne.s32.totalorder %s38, %s39
      %p53 = scmp.eq.s32.totalorder %s19, 7
      %p54 = por %p52, %p53
      %p56 = scmp.ne.s32.totalorder %s39, %s55
      %p57 = scmp.eq.s32.totalorder %s19, 0
      %p58 = por %p56, %p57
      %s59 = ssub.s32 %s21, %s28
      %p60 = scmp.eq.s32.totalorder %s59, 0
      %s62 = sadd.s32 %s61, 1
      %s63 = scalar_select %p60, %s61, %s62
      %p66 = pneg %p60
      %p67 = scmp.eq.s32.totalorder %s13, 7
      %p68 = por %p66, %p67
      %p69 = scmp.ne.s32.totalorder %s61, %s64
      %p70 = scmp.eq.s32.totalorder %s13, 0
      %p71 = por %p69, %p70
      %p72 = scmp.ne.s32.totalorder %s61, %s64
      %p73 = scmp.eq.s32.totalorder %s18, 7
      %p74 = por %p72, %p73
      %p75 = scmp.ne.s32.totalorder %s64, %s65
      %p76 = scmp.eq.s32.totalorder %s18, 0
      %p77 = por %p75, %p76
      %p78 = scmp.ne.s32.totalorder %s64, %s65
      %p79 = scmp.eq.s32.totalorder %s19, 7
      %p80 = por %p78, %p79
      %p82 = scmp.ne.s32.totalorder %s65, %s81
      %p83 = scmp.eq.s32.totalorder %s19, 0
      %p84 = por %p82, %p83
      %s86 = sadd.s32 %s85, 1
      %p89 = scmp.eq.s32.totalorder %s13, 7
      %p90 = scmp.ne.s32.totalorder %s85, %s87
      %p91 = scmp.eq.s32.totalorder %s13, 0
      %p92 = por %p90, %p91
      %p93 = scmp.ne.s32.totalorder %s85, %s87
      %p94 = scmp.eq.s32.totalorder %s18, 7
      %p95 = por %p93, %p94
      %p96 = scmp.ne.s32.totalorder %s87, %s88
      %p97 = scmp.eq.s32.totalorder %s18, 0
      %p98 = por %p96, %p97
      %p99 = scmp.ne.s32.totalorder %s87, %s88
      %p100 = scmp.eq.s32.totalorder %s19, 7
      %p101 = por %p99, %p100
      %p103 = scmp.ne.s32.totalorder %s88, %s102
      %p104 = scmp.eq.s32.totalorder %s19, 0
      %p105 = por %p103, %p104
      %s107 = sadd.s32 %s106, 1
      %p110 = scmp.eq.s32.totalorder %s13, 7
      %p111 = scmp.ne.s32.totalorder %s106, %s108
      %p112 = scmp.eq.s32.totalorder %s13, 0
      %p113 = por %p111, %p112
      %p114 = scmp.ne.s32.totalorder %s106, %s108
      %p115 = scmp.eq.s32.totalorder %s18, 7
      %p116 = por %p114, %p115
      %p117 = scmp.ne.s32.totalorder %s108, %s109
      %p118 = scmp.eq.s32.totalorder %s18, 0
      %p119 = por %p117, %p118
      %p120 = scmp.ne.s32.totalorder %s108, %s109
      %p121 = scmp.eq.s32.totalorder %s19, 7
      %p122 = por %p120, %p121
      %p124 = scmp.ne.s32.totalorder %s109, %s123
      %p125 = scmp.eq.s32.totalorder %s19, 0
      %p126 = por %p124, %p125
      %s127 = ssub.s32 %s20, %s32
      %p128 = scmp.eq.s32.totalorder %s127, 0
      %s130 = sadd.s32 %s129, 1
      %s131 = scalar_select %p128, %s129, %s130
      %p134 = pneg %p128
      %p135 = scmp.eq.s32.totalorder %s13, 7
      %p136 = por %p134, %p135
      %p137 = scmp.ne.s32.totalorder %s129, %s132
      %p138 = scmp.eq.s32.totalorder %s13, 0
      %p139 = por %p137, %p138
      %p140 = scmp.ne.s32.totalorder %s129, %s132
      %p141 = scmp.eq.s32.totalorder %s18, 7
      %p142 = por %p140, %p141
      %p143 = scmp.ne.s32.totalorder %s132, %s133
      %p144 = scmp.eq.s32.totalorder %s18, 0
      %p145 = por %p143, %p144
      %p146 = scmp.ne.s32.totalorder %s132, %s133
      %p147 = scmp.eq.s32.totalorder %s19, 7
      %p148 = por %p146, %p147
      %p150 = scmp.ne.s32.totalorder %s133, %s149
      %p151 = scmp.eq.s32.totalorder %s19, 0
      %p152 = por %p150, %p151
      %p153 = scmp.le.s32.totalorder 1, %s13
      %p154 = scmp.lt.s32.totalorder %s13, 9
      %p155 = pnand %p153, %p154
      %p156 = pneg %p155
      // Predicated region
      $region9: #{tpu_custom_call.1} parent=5 // pred_check
        _
      $region10: #{tpu_custom_call.1} parent=5 // pred_check_branch
        %158 = sbr.rel (%p155) target = $region12
      $region11: #{tpu_custom_call.1} parent=5 // pred_region
        %s159 = ssub.s32 %s13, 1
        // Predicated region
        $region13: #{tpu_custom_call.1} parent=11 // pred_check
          %p160 = pneg %p98
        $region14: #{tpu_custom_call.1} parent=11 // pred_check_branch
          %162 = sbr.rel (%p160) target = $region16
        $region15: #{tpu_custom_call.1} parent=11 // pred_region
          _
        $region16: #{tpu_custom_call.1} parent=11 // pred_fallthru
          _
        // Predicated region
        $region17: #{tpu_custom_call.1} parent=11 // pred_check
          %p163 = pneg %p119
        $region18: #{tpu_custom_call.1} parent=11 // pred_check_branch
          %165 = sbr.rel (%p163) target = $region20
        $region19: #{tpu_custom_call.1} parent=11 // pred_region
          _
        $region20: #{tpu_custom_call.1} parent=11 // pred_fallthru
          _
      $region12: #{tpu_custom_call.1} parent=5 // pred_fallthru
        _
      %p166 = scmp.lt.s32.totalorder %s13, 8
      // Predicated region
      $region21: #{tpu_custom_call.1} parent=5 // pred_check
        %p167 = pneg %p166
      $region22: #{tpu_custom_call.1} parent=5 // pred_check_branch
        %169 = sbr.rel (%p167) target = $region24
      $region23: #{tpu_custom_call.1} parent=5 // pred_region
        // Predicated region
        $region25: #{tpu_custom_call.1} parent=23 // pred_check
          %p170 = pneg %p45
        $region26: #{tpu_custom_call.1} parent=23 // pred_check_branch
          %172 = sbr.rel (%p170) target = $region28
        $region27: #{tpu_custom_call.1} parent=23 // pred_region
          %p173 = scmp.lt.s32.totalorder %s20, 1
          %s174 = scalar_select %p173, %s20, 1
          %s175 = smul.addr %s174, 4
          %s176 = scalar_lea.vmem %s0, %s175
        $region28: #{tpu_custom_call.1} parent=23 // pred_fallthru
          _
        // Predicated region
        $region29: #{tpu_custom_call.1} parent=23 // pred_check
          %p177 = pneg %p71
        $region30: #{tpu_custom_call.1} parent=23 // pred_check_branch
          %179 = sbr.rel (%p177) target = $region32
        $region31: #{tpu_custom_call.1} parent=23 // pred_region
          %p180 = scmp.lt.s32.totalorder %s21, 3
          %s181 = scalar_select %p180, %s21, 3
          %s182 = smul.addr %s181, 4
          %s183 = smul.addr %s182, 4
          %s184 = scalar_lea.vmem %s1, %s183
        $region32: #{tpu_custom_call.1} parent=23 // pred_fallthru
          _
      $region24: #{tpu_custom_call.1} parent=5 // pred_fallthru
        _
      %p185 = scmp.le.s32.totalorder 1, %s13
      %p186 = scmp.lt.s32.totalorder %s13, 9
      %p187 = pnand %p185, %p186
      %p188 = pneg %p187
      // Predicated region
      $region33: #{tpu_custom_call.1} parent=5 // pred_check
        _
      $region34: #{tpu_custom_call.1} parent=5 // pred_check_branch
        %190 = sbr.rel (%p187) target = $region36
      $region35: #{tpu_custom_call.1} parent=5 // pred_region
        %s191 = ssub.s32 %s13, 1
        %p192 = scmp.lt.s32.totalorder %s22, 1
        %s193 = scalar_select %p192, %s22, 1
        %s194 = smul.addr %s193, 4
        %s195 = scalar_lea.vmem %s0, %s194
        %p196 = pneg %p51
        %p197 = pneg %p48
        %p198 = scmp.lt.s32.totalorder %s23, 3
        %s199 = scalar_select %p198, %s23, 3
        %s200 = smul.addr %s199, 4
        %s201 = smul.addr %s200, 4
        %s202 = scalar_lea.vmem %s1, %s201
        %p203 = pneg %p77
        %p204 = pneg %p74
        %p205 = pneg %p98
        %p206 = pneg %p95
        %p207 = pneg %p119
        %p208 = pneg %p116
        %p209 = pneg %p145
        %p210 = pneg %p142
        %s211 = sand.u32 %s132, 1
        %s212 = scalar_lea.sflag [#allocation4], %s211
        %s213 = sand.u32 %s132, 1
        %s214 = smul.addr %s213, 8
        %s215 = scalar_lea.vmem [#allocation3], %s214
        %p216 = scmp.lt.s32.totalorder %s22, 1
        %s217 = scalar_select %p216, %s22, 1
        %s218 = smul.addr %s217, 4
        %s219 = scalar_lea.vmem %s0, %s218
        %p220 = scmp.lt.s32.totalorder %s23, 3
        %s221 = scalar_select %p220, %s23, 3
        %s222 = smul.addr %s221, 4
        %s223 = smul.addr %s222, 4
        %s224 = scalar_lea.vmem %s1, %s223
        %v226 = vld [vmem:[%s219] sm:$0xf]
        %v227 = vld [vmem:[%s224] sm:$0xf]
        %v228 = vld [vmem:[%s224 + $0x4] sm:$0xf]
        %v229 = vld [vmem:[%s224 + $0x8] sm:$0xf]
        %v230 = vld [vmem:[%s224 + $0xc] sm:$0xf]
        %v235 = vunpack.c.l.b16 %v227
        %v236 = vunpack.c.l.b16 %v228
        %v237 = vunpack.c.l.b16 %v229
        %v238 = vunpack.c.l.b16 %v230
        %v239 = vpack.c.b16 %v236, %v235
        %v240 = vpack.c.b16 %v238, %v237
        %vm243 = vcmask 261120
        %v245 = vsel %vm243, %v226, 0
        %247 = vmatpush.bf16.msra.mxu0 0
        %248 = vmatpush.bf16.msra.mxu0 0
        %249 = vmatpush.bf16.msra.mxu0 0
        %250 = vmatpush.bf16.msra.mxu0 0
        %251 = vmatpush.bf16.msra.mxu0 0
        %252 = vmatpush.bf16.msra.mxu0 0
        %253 = vmatpush.bf16.msra.mxu0 %v240
        %254 = vmatpush.bf16.msra.mxu0 %v239
        %255 = vmatmul.bf16.gmra.mxu0 %v245
        %v256 = vpop.f32.mrf.mxu0
        %v257 = vadd.f32 0.0, %v256
        %v258 = vpop.f32.mrf.mxu0
        %259 = vdwg.mxu0
        %v260 = vpack.c.bf16 %v257, %v257
        %262 = vrot.lane.b32.xlu0 %v260, 120
        %v263 = vpop.permute.xlu0 %262
        %vm264 = vcmask 64512
        %v266 = vsel %vm264, %v260, 0
        %v269 = vsel %vm264, %v263, 0
        %271 = vmatpush.bf16.xpose.msra.mxu0 0
        %272 = vmatpush.bf16.xpose.msra.mxu0 0
        %273 = vmatpush.bf16.xpose.msra.mxu0 0
        %274 = vmatpush.bf16.xpose.msra.mxu0 0
        %275 = vmatpush.bf16.xpose.msra.mxu0 0
        %276 = vmatpush.bf16.xpose.msra.mxu0 0
        %277 = vmatpush.bf16.xpose.msra.mxu0 0
        %278 = vmatpush.bf16.xpose.msra.mxu0 %v269
        %279 = vmatmul.bf16.gmra.mxu0 %v266
        %v280 = vpop.f32.mrf.mxu0
        %v281 = vadd.f32 0.0, %v280
        %v282 = vpop.f32.mrf.mxu0
        %283 = vdwg.mxu0
        %v284 = vlaneseq
        %v285 = vshrl.u32 %v284, 7
        %v286 = vlaneseq
        %v287 = vand.u32 %v286, 127
        %vm288 = vcmp.le.s32.totalorder %v287, %v285
        %v289 = vsel %vm288, %v281, -inf
        %v290 = vsel %vm264, %v289, -inf
        %291 = vmax.xlane.f32.xlu0 %v290
        %v292 = vpop.xlane.xlu0 %291
        %v293 = vsub.f32 %v289, %v292
        %v294 = vmul.f32 %v293, 1.442695
        %v295 = vpow.pop %v294
        %v296 = vsel %vm264, %v295, 0.0
        %297 = vadd.xlane.f32.xlu0 %v296
        %v298 = vpop.xlane.xlu0 %297
        %v299 = vpack.c.bf16 %v295, %v295
        %300 = vrot.lane.b32.xlu0 %v260, 112
        %v301 = vpop.permute.xlu0 %300
        %v303 = vsel %vm264, %v299, 0
        %vm305 = vcmask 1043456
        %v307 = vsel %vm305, %v301, 0
        %309 = vmatpush.bf16.msra.mxu0 0
        %310 = vmatpush.bf16.msra.mxu0 0
        %311 = vmatpush.bf16.msra.mxu0 0
        %312 = vmatpush.bf16.msra.mxu0 0
        %313 = vmatpush.bf16.msra.mxu0 0
        %314 = vmatpush.bf16.msra.mxu0 0
        %315 = vmatpush.bf16.msra.mxu0 0
        %316 = vmatpush.bf16.msra.mxu0 %v307
        %317 = vmatmul.bf16.gmra.mxu0 %v303
        %v318 = vpop.f32.mrf.mxu0
        %v319 = vadd.f32 0.0, %v318
        %v320 = vpop.f32.mrf.mxu0
        %321 = vdwg.mxu0
        %v322 = vrcp.pop %v298
        %v323 = vmul.f32 %v319, %v322
        %v324 = vpack.c.bf16 %v323, %v323
        %s325 = smul.addr %s23, 4
        %s326 = scalar_lea.vmem [#allocation2], %s325
        %vm327 = vcmask 60416
        %328 = vst.msk [vmem:[%s326] sm:$0xf] %vm327, %v324
        %p329 = scmp.eq.s32.totalorder %s23, 3
        // Predicated region
        $region37: #{tpu_custom_call.1} parent=35 // pred_check
          %p330 = pneg %p329
        $region38: #{tpu_custom_call.1} parent=35 // pred_check_branch
          %332 = sbr.rel (%p330) target = $region40
        $region39: #{tpu_custom_call.1} parent=35 // pred_region
          %v333 = vld [vmem:[#allocation2] sm:$0xf]
          %s334 = scalar_lea.vmem [#allocation2], 4
          %v335 = vld [vmem:[%s334] sm:$0xf]
          %s336 = scalar_lea.vmem [#allocation2], 8
          %v337 = vld [vmem:[%s336] sm:$0xf]
          %s338 = scalar_lea.vmem [#allocation2], 12
          %v339 = vld [vmem:[%s338] sm:$0xf]
          %v341 = vunpack.c.l.b16 %v335
          %v342 = vpack.c.b16 %v341, %v341
          %343 = vrot.lane.b32.xlu0 %v342, 8
          %v344 = vpop.permute.xlu0 %343
          %v346 = vunpack.c.l.b16 %v337
          %v347 = vpack.c.b16 %v346, %v346
          %348 = vrot.lane.b32.xlu0 %v347, 16
          %v349 = vpop.permute.xlu0 %348
          %v351 = vunpack.c.l.b16 %v339
          %v352 = vpack.c.b16 %v351, %v351
          %353 = vrot.lane.b32.xlu0 %v352, 24
          %v354 = vpop.permute.xlu0 %353
          %v357 = vsel %vm264, %v333, %v344
          %vm358 = vcmask 130048
          %v360 = vsel %vm358, %v357, %v349
          %vm361 = vcmask 195584
          %v363 = vsel %vm361, %v360, %v354
          %v364 = vld [vmem:[%s2] sm:$0xf]
          %v365 = vld [vmem:[%s2 + $0x4] sm:$0xf]
          %v366 = vld [vmem:[%s2 + $0x8] sm:$0xf]
          %v367 = vld [vmem:[%s2 + $0xc] sm:$0xf]
          %v368 = vld [vmem:[%s3] sm:$0x1]
          %v370 = vperm.slane %v368, 0
          %v376 = vunpack.c.l.b16 %v364
          %v377 = vunpack.c.l.b16 %v365
          %v378 = vunpack.c.l.b16 %v366
          %v379 = vunpack.c.l.b16 %v367
          %v380 = vpack.c.b16 %v377, %v376
          %v381 = vpack.c.b16 %v379, %v378
          %v384 = vsel %vm243, %v363, 0
          %386 = vmatpush.bf16.msra.mxu0 0
          %387 = vmatpush.bf16.msra.mxu0 0
          %388 = vmatpush.bf16.msra.mxu0 0
          %389 = vmatpush.bf16.msra.mxu0 0
          %390 = vmatpush.bf16.msra.mxu0 0
          %391 = vmatpush.bf16.msra.mxu0 0
          %392 = vmatpush.bf16.msra.mxu0 %v381
          %393 = vmatpush.bf16.msra.mxu0 %v380
          %394 = vmatmul.bf16.gmra.mxu0 %v384
          %v395 = vpop.f32.mrf.mxu0
          %v396 = vadd.f32 %v370, %v395
          %v397 = vpop.f32.mrf.mxu0
          %398 = vdwg.mxu0
          %399 = vst.msk [vmem:[%s215] sm:$0xff] %vm243, %v396
        $region40: #{tpu_custom_call.1} parent=35 // pred_fallthru
          _
        %s400 = sand.u32 %s132, 1
        %s401 = scalar_lea.sflag [#allocation4], %s400
        %s402 = sand.u32 %s132, 1
        %s403 = smul.addr %s402, 8
        %s404 = scalar_lea.vmem [#allocation3], %s403
        // Predicated region
        $region41: #{tpu_custom_call.1} parent=35 // pred_check
          %p405 = pneg %p142
        $region42: #{tpu_custom_call.1} parent=35 // pred_check_branch
          %407 = sbr.rel (%p405) target = $region44
        $region43: #{tpu_custom_call.1} parent=35 // pred_region
          %409 = vsyncadd %s401, 0
          %s410 = smul.addr %s22, 8
          %s411 = scalar_lea.hbm %s4, %s410
          %s413 = sshll.u32 %s404, 4
          %s414 = int_to_ptr.vmem [resolvable:$true] %s413
          %s415 = sshll.u32 %s411, 4
          %s416 = int_to_ptr.hbm [resolvable:$true] %s415
          %418 = dma.vmem_to_hbm [thread:$0]  %s414, 128, %s416, %s401
        $region44: #{tpu_custom_call.1} parent=35 // pred_fallthru
          _
      $region36: #{tpu_custom_call.1} parent=5 // pred_fallthru
        _
      %p419 = scmp.le.s32.totalorder 2, %s13
      // Predicated region
      $region45: #{tpu_custom_call.1} parent=5 // pred_check
        %p420 = pneg %p419
      $region46: #{tpu_custom_call.1} parent=5 // pred_check_branch
        %422 = sbr.rel (%p420) target = $region48
      $region47: #{tpu_custom_call.1} parent=5 // pred_region
        %s423 = ssub.s32 %s13, 2
        // Predicated region
        $region49: #{tpu_custom_call.1} parent=47 // pred_check
          %p424 = pneg %p148
        $region50: #{tpu_custom_call.1} parent=47 // pred_check_branch
          %426 = sbr.rel (%p424) target = $region52
        $region51: #{tpu_custom_call.1} parent=47 // pred_region
          %s427 = sand.u32 %s133, 1
          %s428 = scalar_lea.sflag [#allocation4], %s427
          %s429 = sand.u32 %s133, 1
          %s430 = smul.addr %s429, 8
          %s431 = scalar_lea.vmem [#allocation3], %s430
          %433 = dma.done %s428, 128
        $region52: #{tpu_custom_call.1} parent=47 // pred_fallthru
          _
      $region48: #{tpu_custom_call.1} parent=5 // pred_fallthru
        _
    $region6: #{tpu_custom_call.1} parent=1 // loop_footer
      %s17 = sadd.s32 1, %s13
    $region7: #{tpu_custom_call.1} parent=1 // loop_footer_branch
      %12 = sbr.rel target = $region3
    $region8: #{tpu_custom_call.1} parent=1 // loop_exit
      _
    %434 = vsyncpa [#allocation4], 1
    %s435 = scalar_lea.sflag [#allocation4], 1
    %436 = vsyncpa %s435, 1

</llo_original>
